<compile_context>
chip_gen: v6e
topology: v6e:2x2x1
jax: 0.10.0
libtpu: 0.0.40
codegen_flags: <defaults>
</compile_context>

<pallas_src>
import jax
import jax.numpy as jnp
import numpy as np
from jax import lax
from jax.experimental import pallas as pl
from jax.experimental.pallas import tpu as pltpu


def _round_up(x, m):
    return ((x + m - 1) // m) * m


def _vmem_limit_bytes():
    # Generation-aware scoped-VMEM budget (~75% of physical):
    # ~96 MiB on v5e/v6e (128 MiB), ~48 MiB on v7x (64 MiB).
    cap = 64 << 20
    try:
        info = pltpu.get_tpu_info()
        cap = int(getattr(info, "vmem_capacity_bytes", cap) or cap)
    except Exception:
        pass
    return (cap * 3) // 4


# ---------------------------------------------------------------------------
# Kernel 1: hoisted input projection for both directions, gate-major outputs.
#   acc = x @ [W_ih_f | W_ih_b] + folded_bias        -> (tm, 6H)
#   stored as 6 separate (tm, H) refs: r_f, z_f, n_f, r_b, z_b, n_b
# ---------------------------------------------------------------------------
def input_proj_kernel(x_ref, w_ref, b_ref,
                      rf_ref, zf_ref, nf_ref, rb_ref, zb_ref, nb_ref):
    # TODO(synk): when gi is stored bf16, also feed bf16 MXU operands (cast
    # x/w in the wrapper) to roughly double projection throughput on v6e/v7x.
    H = x_ref.shape[1]
    acc = jnp.dot(x_ref[...], w_ref[...],
                  preferred_element_type=jnp.float32) + b_ref[...]
    dt = rf_ref.dtype
    rf_ref[...] = acc[:, 0 * H:1 * H].astype(dt)
    zf_ref[...] = acc[:, 1 * H:2 * H].astype(dt)
    nf_ref[...] = acc[:, 2 * H:3 * H].astype(dt)
    rb_ref[...] = acc[:, 3 * H:4 * H].astype(dt)
    zb_ref[...] = acc[:, 4 * H:5 * H].astype(dt)
    nb_ref[...] = acc[:, 5 * H:6 * H].astype(dt)


# ---------------------------------------------------------------------------
# Kernel 2: bidirectional GRU recurrence, single invocation, interleaved
# fwd/bwd time loop, packed-sequence masking, fused fwd+bwd output sum.
# ---------------------------------------------------------------------------
def bigru_recurrent_kernel(
        gi_r_f_ref, gi_z_f_ref, gi_n_f_ref,
        gi_r_b_ref, gi_z_b_ref, gi_n_b_ref,
        lens_ref,
        w_r_f_ref, w_z_f_ref, w_n_f_ref, b_n_f_ref,
        w_r_b_ref, w_z_b_ref, w_n_b_ref, b_n_b_ref,
        out_ref, hid_ref):
    # TODO(synk): for T too large for VMEM, chunk time with an "arbitrary"
    # grid axis carrying h_f/h_b in scratch (fwd write + bwd accumulate of a
    # chunk must stay in the same grid visit). On v7x, split fwd/bwd across
    # the two TensorCores with a leading "parallel" axis of size 2.
    T, B, H = gi_r_f_ref.shape

    lens = lens_ref[...]                          # (B, 1) int32
    out_ref[...] = jnp.zeros_like(out_ref)        # both directions accumulate

    h0 = jnp.zeros((B, H), jnp.float32)

    def gru_step(gi_r, gi_z, gi_n, h, w_r_ref, w_z_ref, w_n_ref, b_n_ref):
        # gi_r/gi_z already contain x@W_i{r,z} + b_i{r,z} + b_h{r,z};
        # gi_n contains x@W_in + b_in. Gate math stays f32 (v5e-safe).
        gh_r = jnp.dot(h, w_r_ref[...], preferred_element_type=jnp.float32)
        gh_z = jnp.dot(h, w_z_ref[...], preferred_element_type=jnp.float32)
        gh_n = (jnp.dot(h, w_n_ref[...], preferred_element_type=jnp.float32)
                + b_n_ref[...])
        r = jax.nn.sigmoid(gi_r.astype(jnp.float32) + gh_r)
        z = jax.nn.sigmoid(gi_z.astype(jnp.float32) + gh_z)
        n = jnp.tanh(gi_n.astype(jnp.float32) + r * gh_n)
        return (1.0 - z) * n + z * h

    def body(i, carry):
        h_f, h_b = carry
        tf = i
        tb = T - 1 - i

        # forward step t = tf
        cand_f = gru_step(gi_r_f_ref[tf], gi_z_f_ref[tf], gi_n_f_ref[tf],
                          h_f, w_r_f_ref, w_z_f_ref, w_n_f_ref, b_n_f_ref)
        m_f = tf < lens                           # (B, 1) bool
        h_f = jnp.where(m_f, cand_f, h_f)         # pack_padded: freeze on pad
        out_ref[tf] = out_ref[tf] + jnp.where(m_f, h_f, 0.0).astype(out_ref.dtype)

        # backward step t = tb (independent chain -> overlaps with fwd)
        cand_b = gru_step(gi_r_b_ref[tb], gi_z_b_ref[tb], gi_n_b_ref[tb],
                          h_b, w_r_b_ref, w_z_b_ref, w_n_b_ref, b_n_b_ref)
        m_b = tb < lens
        h_b = jnp.where(m_b, cand_b, h_b)
        out_ref[tb] = out_ref[tb] + jnp.where(m_b, h_b, 0.0).astype(out_ref.dtype)

        return (h_f, h_b)

    unroll = T if T <= 16 else 4
    h_f_final, h_b_final = lax.fori_loop(0, T, body, (h0, h0), unroll=unroll)

    hid_ref[0] = h_f_final.astype(hid_ref.dtype)
    hid_ref[1] = h_b_final.astype(hid_ref.dtype)


# ---------------------------------------------------------------------------
# Wrapper: EncoderRNN.forward for n_layers=1, hidden=None.
# ---------------------------------------------------------------------------
def encoder_rnn_forward(input_seq, input_lengths, params, hidden_size,
                        gi_dtype=jnp.bfloat16):
    # TODO(synk): n_layers > 1 stacking (layer-1+ input dim 2H) not implemented;
    # the module default is n_layers=1.
    T, B = input_seq.shape
    H = hidden_size
    vmem_limit = _vmem_limit_bytes()

    # glue: embedding lookup stays in XLA (gather).
    embedded = jnp.take(params["embedding"], input_seq, axis=0)          # (T,B,H)
    emb2d = embedded.reshape(T * B, H)

    wih_cat = jnp.concatenate([params["w_ih_f"], params["w_ih_b"]], axis=1)  # (H,6H)
    # Fold b_hh for the r/z gates into the projection bias; only b_hh_n stays
    # in the recurrence (PyTorch: n = tanh(i_n + b_in + r*(h@W_hn + b_hn))).
    bih_cat = jnp.concatenate([
        params["b_ih_f"][:, :2 * H] + params["b_hh_f"][:, :2 * H],
        params["b_ih_f"][:, 2 * H:],
        params["b_ih_b"][:, :2 * H] + params["b_hh_b"][:, :2 * H],
        params["b_ih_b"][:, 2 * H:],
    ], axis=1)                                                           # (1,6H)

    # ---- tiled input projection (both directions, all timesteps) ----
    rows = T * B
    tm = min(256, _round_up(rows, 8))
    rows_p = _round_up(rows, tm)
    if rows_p != rows:
        emb2d = jnp.pad(emb2d, ((0, rows_p - rows), (0, 0)))

    gi_shapes = tuple(jax.ShapeDtypeStruct((rows_p, H), gi_dtype) for _ in range(6))
    gi_parts = pl.pallas_call(
        input_proj_kernel,
        out_shape=gi_shapes,
        grid=(rows_p // tm,),
        in_specs=[pl.BlockSpec((tm, H), lambda i: (i, 0)),
                  pl.BlockSpec((H, 6 * H), lambda i: (0, 0)),
                  pl.BlockSpec((1, 6 * H), lambda i: (0, 0))],
        out_specs=tuple(pl.BlockSpec((tm, H), lambda i: (i, 0)) for _ in range(6)),
        compiler_params=pltpu.CompilerParams(
            dimension_semantics=("parallel",),
            vmem_limit_bytes=vmem_limit),
    )(emb2d, wih_cat, bih_cat)

    gi_r_f, gi_z_f, gi_n_f, gi_r_b, gi_z_b, gi_n_b = (
        g[:rows].reshape(T, B, H) for g in gi_parts)

    # per-gate recurrent weights (lane-aligned (H, H) matmuls in-kernel)
    w_r_f = params["w_hh_f"][:, :H]
    w_z_f = params["w_hh_f"][:, H:2 * H]
    w_n_f = params["w_hh_f"][:, 2 * H:]
    b_n_f = params["b_hh_f"][:, 2 * H:]
    w_r_b = params["w_hh_b"][:, :H]
    w_z_b = params["w_hh_b"][:, H:2 * H]
    w_n_b = params["w_hh_b"][:, 2 * H:]
    b_n_b = params["b_hh_b"][:, 2 * H:]

    lens2d = input_lengths.astype(jnp.int32).reshape(B, 1)

    outputs, hidden = pl.pallas_call(
        bigru_recurrent_kernel,
        out_shape=(jax.ShapeDtypeStruct((T, B, H), jnp.float32),
                   jax.ShapeDtypeStruct((2, B, H), jnp.float32)),
        compiler_params=pltpu.CompilerParams(vmem_limit_bytes=vmem_limit),
    )(gi_r_f, gi_z_f, gi_n_f, gi_r_b, gi_z_b, gi_n_b,
      lens2d,
      w_r_f, w_z_f, w_n_f, b_n_f,
      w_r_b, w_z_b, w_n_b, b_n_b)

    return outputs, hidden


# ---------------------------------------------------------------------------
# Pure-JAX reference (lax.scan) reproducing the PyTorch semantics.
# ---------------------------------------------------------------------------
def _gru_cell(x, h, w_ih, w_hh, b_ih, b_hh):
    H = h.shape[-1]
    gi = jnp.dot(x, w_ih, preferred_element_type=jnp.float32) + b_ih
    gh = jnp.dot(h, w_hh, preferred_element_type=jnp.float32) + b_hh
    i_r, i_z, i_n = gi[:, :H], gi[:, H:2 * H], gi[:, 2 * H:]
    h_r, h_z, h_n = gh[:, :H], gh[:, H:2 * H], gh[:, 2 * H:]
    r = jax.nn.sigmoid(i_r + h_r)
    z = jax.nn.sigmoid(i_z + h_z)
    n = jnp.tanh(i_n + r * h_n)
    return (1.0 - z) * n + z * h


def reference_forward(input_seq, input_lengths, params, H):
    T, B = input_seq.shape
    emb = jnp.take(params["embedding"], input_seq, axis=0)
    mask = (jnp.arange(T)[:, None] < input_lengths[None, :])
    mask = mask.astype(jnp.float32)[:, :, None]

    def run(xs, ms, wih, whh, bih, bhh, reverse):
        if reverse:
            xs, ms = xs[::-1], ms[::-1]

        def step(h, xm):
            x, m = xm
            hn = _gru_cell(x, h, wih, whh, bih, bhh)
            h = m * hn + (1.0 - m) * h
            return h, m * h

        h0 = jnp.zeros((B, H), jnp.float32)
        hT, outs = lax.scan(step, h0, (xs, ms))
        if reverse:
            outs = outs[::-1]
        return outs, hT

    of, hf = run(emb, mask, params["w_ih_f"], params["w_hh_f"],
                 params["b_ih_f"], params["b_hh_f"], False)
    ob, hb = run(emb, mask, params["w_ih_b"], params["w_hh_b"],
                 params["b_ih_b"], params["b_hh_b"], True)
    return of + ob, jnp.stack([hf, hb], axis=0)


def init_params(key, vocab_size, hidden_size):
    H = hidden_size
    keys = jax.random.split(key, 9)
    bound = 1.0 / float(np.sqrt(H))

    def u(kk, shape):
        return jax.random.uniform(kk, shape, jnp.float32, -bound, bound)

    return {
        "embedding": jax.random.normal(keys[0], (vocab_size, H), jnp.float32),
        "w_ih_f": u(keys[1], (H, 3 * H)),   # = PyTorch weight_ih_l0.T
        "w_hh_f": u(keys[2], (H, 3 * H)),   # = PyTorch weight_hh_l0.T
        "b_ih_f": u(keys[3], (1, 3 * H)),
        "b_hh_f": u(keys[4], (1, 3 * H)),
        "w_ih_b": u(keys[5], (H, 3 * H)),   # reverse direction
        "w_hh_b": u(keys[6], (H, 3 * H)),
        "b_ih_b": u(keys[7], (1, 3 * H)),
        "b_hh_b": u(keys[8], (1, 3 * H)),
    }


if __name__ == "__main__":
    T, B, H, V = 8, 2, 32, 20
    key = jax.random.PRNGKey(0)
    k_params, k_seq = jax.random.split(key)

    params = init_params(k_params, V, H)
    input_seq = jax.random.randint(k_seq, (T, B), 0, V, dtype=jnp.int32)
    # pack_padded_sequence expects lengths sorted descending
    input_lengths = jnp.array([8, 5], dtype=jnp.int32)

    # Tight check with f32-stored gi (exact semantics path).
    out32, hid32 = encoder_rnn_forward(input_seq, input_lengths, params, H,
                                       gi_dtype=jnp.float32)
    jax.block_until_ready((out32, hid32))

    ref_out, ref_hid = reference_forward(input_seq, input_lengths, params, H)
    assert out32.shape == (T, B, H) and hid32.shape == (2, B, H)
    assert np.allclose(np.asarray(out32), np.asarray(ref_out), atol=3e-5)
    assert np.allclose(np.asarray(hid32), np.asarray(ref_hid), atol=3e-5)

    # Default (performance) path: bf16-stored gi, f32 gate math.
    out_bf, hid_bf = encoder_rnn_forward(input_seq, input_lengths, params, H)
    jax.block_until_ready((out_bf, hid_bf))
    assert np.allclose(np.asarray(out_bf), np.asarray(ref_out), atol=5e-2)
    assert np.allclose(np.asarray(hid_bf), np.asarray(ref_hid), atol=5e-2)

    print("KERNEL_OK")
</pallas_src>

<mosaic_0001>
module attributes {stable_mosaic.version = 11 : i64} {
  func.func @input_proj_kernel(%arg0: i32, %arg1: memref<16x32xf32, #tpu.memory_space<vmem>>, %arg2: memref<32x192xf32, #tpu.memory_space<vmem>>, %arg3: memref<1x192xf32, #tpu.memory_space<vmem>>, %arg4: memref<16x32xf32, #tpu.memory_space<vmem>>, %arg5: memref<16x32xf32, #tpu.memory_space<vmem>>, %arg6: memref<16x32xf32, #tpu.memory_space<vmem>>, %arg7: memref<16x32xf32, #tpu.memory_space<vmem>>, %arg8: memref<16x32xf32, #tpu.memory_space<vmem>>, %arg9: memref<16x32xf32, #tpu.memory_space<vmem>>) attributes {dimension_semantics = [#tpu.dimension_semantics<parallel>], iteration_bounds = array<i64: 1>, scalar_prefetch = 0 : i64, scratch_operands = 0 : i64, tpu.core_type = #tpu.core_type<tc>, window_params = [{transform_indices = @transform_0, window_bounds = array<i64: 16, 32>}, {pipeline_mode = #tpu.pipeline_mode<synchronous>, transform_indices = @transform_1, window_bounds = array<i64: 32, 192>}, {pipeline_mode = #tpu.pipeline_mode<synchronous>, transform_indices = @transform_2, window_bounds = array<i64: 1, 192>}, {transform_indices = @transform_3, window_bounds = array<i64: 16, 32>}, {transform_indices = @transform_4, window_bounds = array<i64: 16, 32>}, {transform_indices = @transform_5, window_bounds = array<i64: 16, 32>}, {transform_indices = @transform_6, window_bounds = array<i64: 16, 32>}, {transform_indices = @transform_7, window_bounds = array<i64: 16, 32>}, {transform_indices = @transform_8, window_bounds = array<i64: 16, 32>}]} {
    %c0 = arith.constant 0 : index
    %c0_0 = arith.constant 0 : index
    %0 = vector.load %arg1[%c0, %c0_0] : memref<16x32xf32, #tpu.memory_space<vmem>>, vector<16x32xf32>
    %c0_1 = arith.constant 0 : index
    %c0_2 = arith.constant 0 : index
    %1 = vector.load %arg2[%c0_1, %c0_2] : memref<32x192xf32, #tpu.memory_space<vmem>>, vector<32x192xf32>
    %cst = arith.constant dense<0.000000e+00> : vector<16x192xf32>
    %2 = tpu.matmul %0, %1, %cst {dimension_numbers = #tpu.dot_dimension_numbers<[1], [0], [0], [1], [0, 0, 1, 1], [], []>} : vector<16x32xf32>, vector<32x192xf32>, vector<16x192xf32> -> vector<16x192xf32>
    %c0_3 = arith.constant 0 : index
    %c0_4 = arith.constant 0 : index
    %3 = vector.load %arg3[%c0_3, %c0_4] : memref<1x192xf32, #tpu.memory_space<vmem>>, vector<1x192xf32>
    %4 = vector.broadcast %3 : vector<1x192xf32> to vector<16x192xf32>
    %5 = arith.addf %2, %4 : vector<16x192xf32>
    %6 = vector.extract_strided_slice %5 {offsets = [0, 0], sizes = [16, 32], strides = [1, 1]} : vector<16x192xf32> to vector<16x32xf32>
    %c0_5 = arith.constant 0 : index
    %c0_6 = arith.constant 0 : index
    %7 = vector.load %arg4[%c0_5, %c0_6] : memref<16x32xf32, #tpu.memory_space<vmem>>, vector<16x32xf32>
    tpu.vector_store %arg4[%c0_5, %c0_6], %6 {strides = array<i32>} : memref<16x32xf32, #tpu.memory_space<vmem>>, vector<16x32xf32>,
    %8 = vector.extract_strided_slice %5 {offsets = [0, 32], sizes = [16, 32], strides = [1, 1]} : vector<16x192xf32> to vector<16x32xf32>
    %c0_7 = arith.constant 0 : index
    %c0_8 = arith.constant 0 : index
    %9 = vector.load %arg5[%c0_7, %c0_8] : memref<16x32xf32, #tpu.memory_space<vmem>>, vector<16x32xf32>
    tpu.vector_store %arg5[%c0_7, %c0_8], %8 {strides = array<i32>} : memref<16x32xf32, #tpu.memory_space<vmem>>, vector<16x32xf32>,
    %10 = vector.extract_strided_slice %5 {offsets = [0, 64], sizes = [16, 32], strides = [1, 1]} : vector<16x192xf32> to vector<16x32xf32>
    %c0_9 = arith.constant 0 : index
    %c0_10 = arith.constant 0 : index
    %11 = vector.load %arg6[%c0_9, %c0_10] : memref<16x32xf32, #tpu.memory_space<vmem>>, vector<16x32xf32>
    tpu.vector_store %arg6[%c0_9, %c0_10], %10 {strides = array<i32>} : memref<16x32xf32, #tpu.memory_space<vmem>>, vector<16x32xf32>,
    %12 = vector.extract_strided_slice %5 {offsets = [0, 96], sizes = [16, 32], strides = [1, 1]} : vector<16x192xf32> to vector<16x32xf32>
    %c0_11 = arith.constant 0 : index
    %c0_12 = arith.constant 0 : index
    %13 = vector.load %arg7[%c0_11, %c0_12] : memref<16x32xf32, #tpu.memory_space<vmem>>, vector<16x32xf32>
    tpu.vector_store %arg7[%c0_11, %c0_12], %12 {strides = array<i32>} : memref<16x32xf32, #tpu.memory_space<vmem>>, vector<16x32xf32>,
    %14 = vector.extract_strided_slice %5 {offsets = [0, 128], sizes = [16, 32], strides = [1, 1]} : vector<16x192xf32> to vector<16x32xf32>
    %c0_13 = arith.constant 0 : index
    %c0_14 = arith.constant 0 : index
    %15 = vector.load %arg8[%c0_13, %c0_14] : memref<16x32xf32, #tpu.memory_space<vmem>>, vector<16x32xf32>
    tpu.vector_store %arg8[%c0_13, %c0_14], %14 {strides = array<i32>} : memref<16x32xf32, #tpu.memory_space<vmem>>, vector<16x32xf32>,
    %16 = vector.extract_strided_slice %5 {offsets = [0, 160], sizes = [16, 32], strides = [1, 1]} : vector<16x192xf32> to vector<16x32xf32>
    %c0_15 = arith.constant 0 : index
    %c0_16 = arith.constant 0 : index
    %17 = vector.load %arg9[%c0_15, %c0_16] : memref<16x32xf32, #tpu.memory_space<vmem>>, vector<16x32xf32>
    tpu.vector_store %arg9[%c0_15, %c0_16], %16 {strides = array<i32>} : memref<16x32xf32, #tpu.memory_space<vmem>>, vector<16x32xf32>,
    return
  }
  func.func @transform_0(%arg0: i32) -> (i32, i32) {
    %c0_i32 = arith.constant 0 : i32
    %c0_i32_0 = arith.constant 0 : i32
    return %arg0, %c0_i32 : i32, i32
  }
  func.func @transform_1(%arg0: i32) -> (i32, i32) {
    %c0_i32 = arith.constant 0 : i32
    %c0_i32_0 = arith.constant 0 : i32
    %c0_i32_1 = arith.constant 0 : i32
    return %c0_i32, %c0_i32_0 : i32, i32
  }
  func.func @transform_2(%arg0: i32) -> (i32, i32) {
    %c0_i32 = arith.constant 0 : i32
    %c0_i32_0 = arith.constant 0 : i32
    %c0_i32_1 = arith.constant 0 : i32
    return %c0_i32, %c0_i32_0 : i32, i32
  }
  func.func @transform_3(%arg0: i32) -> (i32, i32) {
    %c0_i32 = arith.constant 0 : i32
    %c0_i32_0 = arith.constant 0 : i32
    return %arg0, %c0_i32 : i32, i32
  }
  func.func @transform_4(%arg0: i32) -> (i32, i32) {
    %c0_i32 = arith.constant 0 : i32
    %c0_i32_0 = arith.constant 0 : i32
    return %arg0, %c0_i32 : i32, i32
  }
  func.func @transform_5(%arg0: i32) -> (i32, i32) {
    %c0_i32 = arith.constant 0 : i32
    %c0_i32_0 = arith.constant 0 : i32
    return %arg0, %c0_i32 : i32, i32
  }
  func.func @transform_6(%arg0: i32) -> (i32, i32) {
    %c0_i32 = arith.constant 0 : i32
    %c0_i32_0 = arith.constant 0 : i32
    return %arg0, %c0_i32 : i32, i32
  }
  func.func @transform_7(%arg0: i32) -> (i32, i32) {
    %c0_i32 = arith.constant 0 : i32
    %c0_i32_0 = arith.constant 0 : i32
    return %arg0, %c0_i32 : i32, i32
  }
  func.func @transform_8(%arg0: i32) -> (i32, i32) {
    %c0_i32 = arith.constant 0 : i32
    %c0_i32_0 = arith.constant 0 : i32
    return %arg0, %c0_i32 : i32, i32
  }
}

</mosaic_0001>

<llo_original>
// kernel: tpu_custom_call.1
$region0: #{tpu_custom_call.1}
  #allocation0 [shape = 'u32[]', space=smem, size = 0x4, offset = 0x4, fixed_abs, tag = 'smem constant byte address 0x4 - core index']
  #allocation1 [shape = 'u32[144,128]{1,0:T(1,128)}', space=vmem, size = 0x12000, scoped, tag = 'internal scratch']
  %s0 = inlined_call_operand.hbm [shape: f32[16,32], index: 0, kind: input, shape index: {}]
  %s1 = inlined_call_operand.hbm [shape: f32[32,192], index: 1, kind: input, shape index: {}]
  %s2 = inlined_call_operand.vmem [shape: f32[1,192], index: 2, kind: input, shape index: {}]
  %s3 = inlined_call_operand.hbm [shape: f32[16,32], index: 3, kind: output, shape index: {0}]
  %s4 = inlined_call_operand.hbm [shape: f32[16,32], index: 4, kind: output, shape index: {1}]
  %s5 = inlined_call_operand.hbm [shape: f32[16,32], index: 5, kind: output, shape index: {2}]
  %s6 = inlined_call_operand.hbm [shape: f32[16,32], index: 6, kind: output, shape index: {3}]
  %s7 = inlined_call_operand.hbm [shape: f32[16,32], index: 7, kind: output, shape index: {4}]
  %s8 = inlined_call_operand.hbm [shape: f32[16,32], index: 8, kind: output, shape index: {5}]
  %9 = xla_tuple %s3, %s4, %s5, %s6, %s7, %s8
  %s10 = sld [smem:[#allocation0]]
  $region70: #{tpu_custom_call.1} parent=0
    _
  %s12 = ssub.s32 1, %s10
  %s13 = scalar_select 0, %s12, %s10
  $region1: #{tpu_custom_call.1} parent=0
    #allocation2 [shape = 'u8[8192]{0}', space=vmem, size = 0x2000, scoped, tag = 'input window, operand 0, single buffered']
    #allocation3 [shape = 's32[1]{0}', space=sflag, size = 0x4, scoped, tag = 'scoped memory for tpu_custom_call.1']
    #allocation4 [shape = 's32[1]{0}', space=sflag, size = 0x4, scoped, tag = 'scoped memory for tpu_custom_call.1']
    #allocation5 [shape = 'u8[32768]{0}', space=vmem, size = 0x8000, scoped, tag = 'input window, operand 1, single buffered']
    #allocation6 [shape = 's32[1]{0}', space=sflag, size = 0x4, scoped, tag = 'scoped memory for tpu_custom_call.1']
    #allocation7 [shape = 'u8[8192]{0}', space=vmem, size = 0x2000, scoped, tag = 'output window, operand 0, single buffered']
    #allocation8 [shape = 'u8[8192]{0}', space=vmem, size = 0x2000, scoped, tag = 'output window, operand 1, single buffered']
    #allocation9 [shape = 's32[1]{0}', space=sflag, size = 0x4, scoped, tag = 'scoped memory for tpu_custom_call.1']
    #allocation10 [shape = 'u8[8192]{0}', space=vmem, size = 0x2000, scoped, tag = 'output window, operand 2, single buffered']
    #allocation11 [shape = 'u8[8192]{0}', space=vmem, size = 0x2000, scoped, tag = 'output window, operand 3, single buffered']
    #allocation12 [shape = 's32[1]{0}', space=sflag, size = 0x4, scoped, tag = 'scoped memory for tpu_custom_call.1']
    #allocation13 [shape = 'u8[8192]{0}', space=vmem, size = 0x2000, scoped, tag = 'output window, operand 4, single buffered']
    #allocation14 [shape = 'u8[8192]{0}', space=vmem, size = 0x2000, scoped, tag = 'output window, operand 5, single buffered']
    #allocation15 [shape = 's32[1]{0}', space=sflag, size = 0x4, scoped, tag = 'scoped memory for tpu_custom_call.1']
    %14 = vsyncpa [#allocation3], 0
    %15 = vsyncpa [#allocation6], 0
    %16 = vsyncpa [#allocation4], 0
    %17 = vsyncpa [#allocation9], 0
    %18 = vsyncpa [#allocation12], 0
    %19 = vsyncpa [#allocation15], 0
    // Predicated region
    $region2: #{tpu_custom_call.1} parent=1 // pred_check
      _
    $region3: #{tpu_custom_call.1} parent=1 // pred_check_branch
      %21 = sbr.rel (0) target = $region5
    $region4: #{tpu_custom_call.1} parent=1 // pred_region
      %s23 = ssub.s32 256, 256
      %24 = vsyncadd [#allocation3], %s23
      %s25 = sshll.u32 [#allocation2], 4
      %s26 = int_to_ptr.vmem [resolvable:$true] %s25
      %31 = dma.hbm_to_vmem [thread:$0]  %s0, 256, %s26, [#allocation3], 128, 128, 8
    $region5: #{tpu_custom_call.1} parent=1 // pred_fallthru
      _
    // Predicated region
    $region6: #{tpu_custom_call.1} parent=1 // pred_check
      _
    $region7: #{tpu_custom_call.1} parent=1 // pred_check_branch
      %33 = sbr.rel (0) target = $region9
    $region8: #{tpu_custom_call.1} parent=1 // pred_region
      %s35 = ssub.s32 1024, 1024
      %36 = vsyncadd [#allocation6], %s35
      %s37 = sshll.u32 [#allocation5], 4
      %s38 = int_to_ptr.vmem [resolvable:$true] %s37
      %43 = dma.hbm_to_vmem [thread:$0]  %s1, 1024, %s38, [#allocation6], 256, 256, 16
    $region9: #{tpu_custom_call.1} parent=1 // pred_fallthru
      _
    // Predicated region
    $region10: #{tpu_custom_call.1} parent=1 // pred_check
      _
    $region11: #{tpu_custom_call.1} parent=1 // pred_check_branch
      %45 = sbr.rel (0) target = $region13
    $region12: #{tpu_custom_call.1} parent=1 // pred_region
      _
    $region13: #{tpu_custom_call.1} parent=1 // pred_fallthru
      _
    // Predicated region
    $region14: #{tpu_custom_call.1} parent=1 // pred_check
      _
    $region15: #{tpu_custom_call.1} parent=1 // pred_check_branch
      %47 = sbr.rel (0) target = $region17
    $region16: #{tpu_custom_call.1} parent=1 // pred_region
      %48 = dma.done [#allocation3], 256
    $region17: #{tpu_custom_call.1} parent=1 // pred_fallthru
      _
    // Predicated region
    $region18: #{tpu_custom_call.1} parent=1 // pred_check
      _
    $region19: #{tpu_custom_call.1} parent=1 // pred_check_branch
      %50 = sbr.rel (0) target = $region21
    $region20: #{tpu_custom_call.1} parent=1 // pred_region
      %51 = dma.done [#allocation6], 1024
    $region21: #{tpu_custom_call.1} parent=1 // pred_fallthru
      _
    %v52 = vld [vmem:[#allocation2] sm:$0xff]
    %v53 = vld [vmem:[#allocation2 + $0x8] sm:$0xff]
    %v54 = vld [vmem:[#allocation5] sm:$0xff]
    %v55 = vld [vmem:[#allocation5 + $0x8] sm:$0xff]
    %v56 = vld [vmem:[#allocation5 + $0x10] sm:$0xff]
    %v57 = vld [vmem:[#allocation5 + $0x18] sm:$0xff]
    %v58 = vld [vmem:[#allocation5 + $0x20] sm:$0xff]
    %v59 = vld [vmem:[#allocation5 + $0x28] sm:$0xff]
    %v60 = vld [vmem:[#allocation5 + $0x30] sm:$0xff]
    %v61 = vld [vmem:[#allocation5 + $0x38] sm:$0xff]
    %v62 = vld [vmem:[%s2] sm:$0x3]
    %v64 = vlaneseq
    %v65 = vshrl.u32 %v64, 7
    %v66 = vsub.s32 0, %v65
    %v67 = vrot.slane %v62, %v66
    %v68 = vlaneseq
    %v69 = vshrl.u32 %v68, 7
    %v70 = vsub.s32 1, %v69
    %v71 = vrot.slane %v62, %v70
    %vm74 = vcmask 261120
    %v76 = vsel %vm74, %v52, 0
    %v79 = vsel %vm74, %v53, 0
    %81 = vmatprep.subr.mxu0 0.0
    %82 = vmatpush1.msra.mxu0 0.0
    %83 = vmatprep.subr.mxu0 0.0
    %84 = vmatpush1.msra.mxu0 0.0
    %85 = vmatprep.subr.mxu0 0.0
    %86 = vmatpush1.msra.mxu0 0.0
    %87 = vmatprep.subr.mxu0 0.0
    %88 = vmatpush1.msra.mxu0 0.0
    %89 = vmatprep.subr.mxu0 0.0
    %90 = vmatpush1.msra.mxu0 0.0
    %91 = vmatprep.subr.mxu0 0.0
    %92 = vmatpush1.msra.mxu0 0.0
    %93 = vmatprep.subr.mxu0 0.0
    %94 = vmatpush1.msra.mxu0 0.0
    %95 = vmatprep.subr.mxu0 0.0
    %96 = vmatpush1.msra.mxu0 0.0
    %97 = vmatprep.subr.mxu0 0.0
    %98 = vmatpush1.msra.mxu0 0.0
    %99 = vmatprep.subr.mxu0 0.0
    %100 = vmatpush1.msra.mxu0 0.0
    %101 = vmatprep.subr.mxu0 0.0
    %102 = vmatpush1.msra.mxu0 0.0
    %103 = vmatprep.subr.mxu0 0.0
    %104 = vmatpush1.msra.mxu0 0.0
    %105 = vmatprep.subr.mxu0 %v61
    %106 = vmatpush1.msra.mxu0 %v60
    %107 = vmatprep.subr.mxu0 %v59
    %108 = vmatpush1.msra.mxu0 %v58
    %109 = vmatprep.subr.mxu0 %v57
    %110 = vmatpush1.msra.mxu0 %v56
    %111 = vmatprep.subr.mxu0 %v55
    %112 = vmatpush1.msra.mxu0 %v54
    %113 = vmatprep.subr.mxu0 0.0
    %114 = vmatpush2.msra.mxu0 0.0
    %115 = vmatprep.subr.mxu0 0.0
    %116 = vmatpush2.msra.mxu0 0.0
    %117 = vmatprep.subr.mxu0 0.0
    %118 = vmatpush2.msra.mxu0 0.0
    %119 = vmatprep.subr.mxu0 0.0
    %120 = vmatpush2.msra.mxu0 0.0
    %121 = vmatprep.subr.mxu0 0.0
    %122 = vmatpush2.msra.mxu0 0.0
    %123 = vmatprep.subr.mxu0 0.0
    %124 = vmatpush2.msra.mxu0 0.0
    %125 = vmatprep.subr.mxu0 0.0
    %126 = vmatpush2.msra.mxu0 0.0
    %127 = vmatprep.subr.mxu0 0.0
    %128 = vmatpush2.msra.mxu0 0.0
    %129 = vmatprep.subr.mxu0 0.0
    %130 = vmatpush2.msra.mxu0 0.0
    %131 = vmatprep.subr.mxu0 0.0
    %132 = vmatpush2.msra.mxu0 0.0
    %133 = vmatprep.subr.mxu0 0.0
    %134 = vmatpush2.msra.mxu0 0.0
    %135 = vmatprep.subr.mxu0 0.0
    %136 = vmatpush2.msra.mxu0 0.0
    %137 = vmatprep.subr.mxu0 0.0
    %138 = vmatpush2.msra.mxu0 0.0
    %139 = vmatprep.subr.mxu0 0.0
    %140 = vmatpush2.msra.mxu0 0.0
    %141 = vmatprep.subr.mxu0 0.0
    %142 = vmatpush2.msra.mxu0 0.0
    %143 = vmatprep.subr.mxu0 0.0
    %144 = vmatpush2.msra.mxu0 0.0
    %145 = vmatprep.mubr.f32.mxu0 0.0
    %146 = vmatmul.mubr.f32.gmra.mxu0 %v76
    %v147 = vpop.f32.mrf.mxu0
    %v148 = vadd.f32 %v67, %v147
    %v149 = vpop.f32.mrf.mxu0
    %v150 = vadd.f32 %v71, %v149
    %151 = vmatprep.mubr.f32.mxu0 0.0
    %152 = vmatmul.mubr.f32.gmra.mxu0 %v79
    %v153 = vpop.f32.mrf.mxu0
    %v154 = vadd.f32 %v67, %v153
    %v155 = vpop.f32.mrf.mxu0
    %v156 = vadd.f32 %v71, %v155
    %157 = vdwg.mxu0
    %158 = vst.msk [vmem:[#allocation7] sm:$0xff] %vm74, %v148
    %159 = vst.msk [vmem:[#allocation7 + $0x8] sm:$0xff] %vm74, %v154
    %162 = vrot.lane.b32.xlu0 %v148, 96
    %v163 = vpop.permute.xlu0 %162
    %164 = vrot.lane.b32.xlu0 %v154, 96
    %v165 = vpop.permute.xlu0 %164
    %168 = vst.msk [vmem:[#allocation8] sm:$0xff] %vm74, %v163
    %169 = vst.msk [vmem:[#allocation8 + $0x8] sm:$0xff] %vm74, %v165
    %170 = vrot.lane.b32.xlu0 %v148, 64
    %v171 = vpop.permute.xlu0 %170
    %172 = vrot.lane.b32.xlu0 %v154, 64
    %v173 = vpop.permute.xlu0 %172
    %176 = vst.msk [vmem:[#allocation10] sm:$0xff] %vm74, %v171
    %177 = vst.msk [vmem:[#allocation10 + $0x8] sm:$0xff] %vm74, %v173
    %178 = vrot.lane.b32.xlu0 %v148, 32
    %v179 = vpop.permute.xlu0 %178
    %180 = vrot.lane.b32.xlu0 %v154, 32
    %v181 = vpop.permute.xlu0 %180
    %184 = vst.msk [vmem:[#allocation11] sm:$0xff] %vm74, %v179
    %185 = vst.msk [vmem:[#allocation11 + $0x8] sm:$0xff] %vm74, %v181
    %186 = vst.msk [vmem:[#allocation13] sm:$0xff] %vm74, %v150
    %187 = vst.msk [vmem:[#allocation13 + $0x8] sm:$0xff] %vm74, %v156
    %190 = vrot.lane.b32.xlu0 %v150, 96
    %v191 = vpop.permute.xlu0 %190
    %192 = vrot.lane.b32.xlu0 %v156, 96
    %v193 = vpop.permute.xlu0 %192
    %196 = vst.msk [vmem:[#allocation14] sm:$0xff] %vm74, %v191
    %197 = vst.msk [vmem:[#allocation14 + $0x8] sm:$0xff] %vm74, %v193
    // Predicated region
    $region22: #{tpu_custom_call.1} parent=1 // pred_check
      _
    $region23: #{tpu_custom_call.1} parent=1 // pred_check_branch
      %199 = sbr.rel (0) target = $region25
    $region24: #{tpu_custom_call.1} parent=1 // pred_region
      %s201 = ssub.s32 256, 256
      %202 = vsyncadd [#allocation4], %s201
      %s203 = sshll.u32 [#allocation7], 4
      %s204 = int_to_ptr.vmem [resolvable:$true] %s203
      %209 = dma.vmem_to_hbm [thread:$0]  %s204, 256, %s3, [#allocation4], 128, 128, 8
    $region25: #{tpu_custom_call.1} parent=1 // pred_fallthru
      _
    // Predicated region
    $region26: #{tpu_custom_call.1} parent=1 // pred_check
      _
    $region27: #{tpu_custom_call.1} parent=1 // pred_check_branch
      %211 = sbr.rel (0) target = $region29
    $region28: #{tpu_custom_call.1} parent=1 // pred_region
      %s213 = ssub.s32 256, 256
      %214 = vsyncadd [#allocation9], %s213
      %s215 = sshll.u32 [#allocation8], 4
      %s216 = int_to_ptr.vmem [resolvable:$true] %s215
      %221 = dma.vmem_to_hbm [thread:$0]  %s216, 256, %s4, [#allocation9], 128, 128, 8
    $region29: #{tpu_custom_call.1} parent=1 // pred_fallthru
      _
    // Predicated region
    $region30: #{tpu_custom_call.1} parent=1 // pred_check
      _
    $region31: #{tpu_custom_call.1} parent=1 // pred_check_branch
      %223 = sbr.rel (0) target = $region33
    $region32: #{tpu_custom_call.1} parent=1 // pred_region
      %s225 = ssub.s32 256, 256
      %226 = vsyncadd [#allocation9], %s225
      %s227 = sshll.u32 [#allocation10], 4
      %s228 = int_to_ptr.vmem [resolvable:$true] %s227
      %233 = dma.vmem_to_hbm [thread:$0]  %s228, 256, %s5, [#allocation9], 128, 128, 8
    $region33: #{tpu_custom_call.1} parent=1 // pred_fallthru
      _
    // Predicated region
    $region34: #{tpu_custom_call.1} parent=1 // pred_check
      _
    $region35: #{tpu_custom_call.1} parent=1 // pred_check_branch
      %235 = sbr.rel (0) target = $region37
    $region36: #{tpu_custom_call.1} parent=1 // pred_region
      %s237 = ssub.s32 256, 256
      %238 = vsyncadd [#allocation12], %s237
      %s239 = sshll.u32 [#allocation11], 4
      %s240 = int_to_ptr.vmem [resolvable:$true] %s239
      %245 = dma.vmem_to_hbm [thread:$0]  %s240, 256, %s6, [#allocation12], 128, 128, 8
    $region37: #{tpu_custom_call.1} parent=1 // pred_fallthru
      _
    // Predicated region
    $region38: #{tpu_custom_call.1} parent=1 // pred_check
      _
    $region39: #{tpu_custom_call.1} parent=1 // pred_check_branch
      %247 = sbr.rel (0) target = $region41
    $region40: #{tpu_custom_call.1} parent=1 // pred_region
      %s249 = ssub.s32 256, 256
      %250 = vsyncadd [#allocation12], %s249
      %s251 = sshll.u32 [#allocation13], 4
      %s252 = int_to_ptr.vmem [resolvable:$true] %s251
      %257 = dma.vmem_to_hbm [thread:$0]  %s252, 256, %s7, [#allocation12], 128, 128, 8
    $region41: #{tpu_custom_call.1} parent=1 // pred_fallthru
      _
    // Predicated region
    $region42: #{tpu_custom_call.1} parent=1 // pred_check
      _
    $region43: #{tpu_custom_call.1} parent=1 // pred_check_branch
      %259 = sbr.rel (0) target = $region45
    $region44: #{tpu_custom_call.1} parent=1 // pred_region
      %s261 = ssub.s32 256, 256
      %262 = vsyncadd [#allocation15], %s261
      %s263 = sshll.u32 [#allocation14], 4
      %s264 = int_to_ptr.vmem [resolvable:$true] %s263
      %269 = dma.vmem_to_hbm [thread:$0]  %s264, 256, %s8, [#allocation15], 128, 128, 8
    $region45: #{tpu_custom_call.1} parent=1 // pred_fallthru
      _
    // Predicated region
    $region46: #{tpu_custom_call.1} parent=1 // pred_check
      _
    $region47: #{tpu_custom_call.1} parent=1 // pred_check_branch
      %271 = sbr.rel (0) target = $region49
    $region48: #{tpu_custom_call.1} parent=1 // pred_region
      %272 = dma.done [#allocation4], 256
    $region49: #{tpu_custom_call.1} parent=1 // pred_fallthru
      _
    // Predicated region
    $region50: #{tpu_custom_call.1} parent=1 // pred_check
      _
    $region51: #{tpu_custom_call.1} parent=1 // pred_check_branch
      %274 = sbr.rel (0) target = $region53
    $region52: #{tpu_custom_call.1} parent=1 // pred_region
      %275 = dma.done [#allocation9], 256
    $region53: #{tpu_custom_call.1} parent=1 // pred_fallthru
      _
    // Predicated region
    $region54: #{tpu_custom_call.1} parent=1 // pred_check
      _
    $region55: #{tpu_custom_call.1} parent=1 // pred_check_branch
      %277 = sbr.rel (0) target = $region57
    $region56: #{tpu_custom_call.1} parent=1 // pred_region
      %278 = dma.done [#allocation9], 256
    $region57: #{tpu_custom_call.1} parent=1 // pred_fallthru
      _
    // Predicated region
    $region58: #{tpu_custom_call.1} parent=1 // pred_check
      _
    $region59: #{tpu_custom_call.1} parent=1 // pred_check_branch
      %280 = sbr.rel (0) target = $region61
    $region60: #{tpu_custom_call.1} parent=1 // pred_region
      %281 = dma.done [#allocation12], 256
    $region61: #{tpu_custom_call.1} parent=1 // pred_fallthru
      _
    // Predicated region
    $region62: #{tpu_custom_call.1} parent=1 // pred_check
      _
    $region63: #{tpu_custom_call.1} parent=1 // pred_check_branch
      %283 = sbr.rel (0) target = $region65
    $region64: #{tpu_custom_call.1} parent=1 // pred_region
      %284 = dma.done [#allocation12], 256
    $region65: #{tpu_custom_call.1} parent=1 // pred_fallthru
      _
    // Predicated region
    $region66: #{tpu_custom_call.1} parent=1 // pred_check
      _
    $region67: #{tpu_custom_call.1} parent=1 // pred_check_branch
      %286 = sbr.rel (0) target = $region69
    $region68: #{tpu_custom_call.1} parent=1 // pred_region
      %287 = dma.done [#allocation15], 256
    $region69: #{tpu_custom_call.1} parent=1 // pred_fallthru
      _
    %288 = vsyncpa [#allocation3], 1
    %289 = vsyncpa [#allocation6], 1
    %290 = vsyncpa [#allocation4], 1
    %291 = vsyncpa [#allocation9], 1
    %292 = vsyncpa [#allocation12], 1
    %293 = vsyncpa [#allocation15], 1

</llo_original>
